<compile_context>
chip_gen: v7x
topology: tpu7x:2x2x1
jax: 0.10.0
libtpu: 0.0.40
codegen_flags: <defaults>
</compile_context>

<pallas_src>
import math
import functools

import jax
import jax.numpy as jnp
from jax.experimental import pallas as pl
from jax.experimental.pallas import tpu as pltpu


def make_pe_buffer(max_len: int, d_model: int) -> jnp.ndarray:
    """Deterministic sinusoidal PE table (mirrors the module's __init__)."""
    position = jnp.arange(0, max_len, dtype=jnp.float32)[:, None]             # (L, 1)
    div_term = jnp.exp(
        jnp.arange(0, d_model, 2, dtype=jnp.float32)
        * -(math.log(10000.0) / d_model)
    )                                                                          # (D/2,)
    angles = position * div_term                                               # (L, D/2)
    pe = jnp.zeros((max_len, d_model), dtype=jnp.float32)
    pe = pe.at[:, 0::2].set(jnp.sin(angles))
    pe = pe.at[:, 1::2].set(jnp.cos(angles))
    return pe                                                                  # (L, D)


def _mix32(h):
    """murmur3 finalizer on uint32 (good decorrelation for dropout masks)."""
    h = h ^ (h >> 16)
    h = h * jnp.uint32(0x85EBCA6B)
    h = h ^ (h >> 13)
    h = h * jnp.uint32(0xC2B2AE35)
    h = h ^ (h >> 16)
    return h


def _pe_dropout_kernel(seed_ref, x_ref, pe_ref, o_ref, *,
                       dropout_p, train, tb, tn, n_total):
    # x_ref: (tb, tn) block;  pe_ref: (1, tn) block (resident across batch sweep)
    y = x_ref[...] + pe_ref[...]                                               # broadcast add

    if train and dropout_p > 0.0:
        n_idx = pl.program_id(0)
        b_idx = pl.program_id(1)
        # Global element index -> stateless counter-hash PRNG (parallel-safe,
        # deterministic, independent of tiling).
        rows = jax.lax.broadcasted_iota(jnp.int32, (tb, tn), 0)
        cols = jax.lax.broadcasted_iota(jnp.int32, (tb, tn), 1)
        g_row = rows + b_idx * tb
        g_col = cols + n_idx * tn
        ctr = (g_row * n_total + g_col).astype(jnp.uint32)
        seed_u = seed_ref[0].astype(jnp.uint32)
        h = _mix32(ctr + seed_u * jnp.uint32(0x9E3779B9))                      # mix seed in
        r = (h & jnp.uint32(0x7FFFFFFF)).astype(jnp.int32)                     # uniform [0, 2^31)
        thresh = jnp.int32(min(int(dropout_p * (1 << 31)), (1 << 31) - 1))
        keep = r >= thresh                                                     # P(drop) ~= p
        scale = jnp.asarray(1.0 / (1.0 - dropout_p), dtype=y.dtype)
        y = jnp.where(keep, y * scale, jnp.zeros_like(y))                      # inverted dropout

    o_ref[...] = y.astype(o_ref.dtype)


def _pick_lane_tile(n, rows, itemsize, max_block_bytes=2 * 1024 * 1024):
    """Largest multiple-of-128 tile dividing n, with (rows, tile) under a byte cap."""
    if n % 128 != 0:
        return n  # full last dim is always a legal block shape
    max_elems = max(128, max_block_bytes // max(1, rows * itemsize))
    best, cand = 128, 128
    while cand <= n and cand <= max_elems:
        if n % cand == 0:
            best = cand
        cand += 128
    return best


def positional_encoding_forward(x, pe_full, *, dropout_p=0.0, train=False, seed=0):
    """x: (B, S, D).  pe_full: (max_len, D) buffer.  Returns (B, S, D)."""
    B, S, D = x.shape
    N = S * D

    # Lane-dense flatten; elementwise add/dropout preserves (s, d) correspondence.
    x2 = x.reshape(B, N)
    pe2 = pe_full[:S, :].astype(x.dtype).reshape(1, N)   # slice + cast once in wrapper

    itemsize = jnp.dtype(x.dtype).itemsize
    tb = B if B <= 8 else 8
    tn = _pick_lane_tile(N, tb, itemsize)
    grid = (pl.cdiv(N, tn), pl.cdiv(B, tb))              # seq/feature outer, batch inner

    kernel = functools.partial(
        _pe_dropout_kernel,
        dropout_p=float(dropout_p), train=bool(train),
        tb=tb, tn=tn, n_total=N,
    )
    seed_arr = jnp.asarray([seed], dtype=jnp.int32)

    out2 = pl.pallas_call(
        kernel,
        out_shape=jax.ShapeDtypeStruct((B, N), x.dtype),
        grid_spec=pltpu.PrefetchScalarGridSpec(
            num_scalar_prefetch=1,
            grid=grid,
            in_specs=[
                pl.BlockSpec((tb, tn), lambda n, b, seed_ref: (b, n)),   # x
                pl.BlockSpec((1, tn), lambda n, b, seed_ref: (0, n)),    # pe (resident over b)
            ],
            out_specs=pl.BlockSpec((tb, tn), lambda n, b, seed_ref: (b, n)),
        ),
        compiler_params=pltpu.CompilerParams(
            dimension_semantics=("parallel", "parallel"),  # stateless PRNG => parallel-safe
        ),
    )(seed_arr, x2, pe2)

    return out2.reshape(B, S, D)


if __name__ == "__main__":
    # Small shapes consistent with the module: batch=2, seq=8, d_model=32.
    B, S, D = 2, 8, 32
    MAX_LEN = 5000
    DROPOUT_P = 0.1

    key = jax.random.PRNGKey(0)
    x = jax.random.normal(key, (B, S, D), dtype=jnp.float32)
    pe_full = make_pe_buffer(MAX_LEN, D)

    ref = x + pe_full[:S][None, :, :]

    # Eval-mode forward (dropout is identity) -- exact check against reference.
    out_eval = jax.block_until_ready(
        positional_encoding_forward(x, pe_full, dropout_p=DROPOUT_P, train=False)
    )
    assert out_eval.shape == (B, S, D)
    assert jnp.allclose(out_eval, ref, atol=1e-6, rtol=1e-6), "eval mismatch vs reference"

    # Training-mode forward (inverted dropout, deterministic stateless hash PRNG).
    out_train = jax.block_until_ready(
        positional_encoding_forward(x, pe_full, dropout_p=DROPOUT_P, train=True, seed=123)
    )
    assert out_train.shape == (B, S, D)
    kept = out_train != 0.0
    # Kept elements must equal ref / (1 - p); dropped elements are 0.
    assert jnp.allclose(
        jnp.where(kept, out_train, 0.0),
        jnp.where(kept, ref / (1.0 - DROPOUT_P), 0.0),
        atol=1e-5, rtol=1e-5,
    ), "train-mode kept values mismatch"
    drop_frac = float(1.0 - jnp.mean(kept.astype(jnp.float32)))
    assert 0.0 <= drop_frac <= 0.5, f"implausible drop fraction {drop_frac}"

    print("KERNEL_OK")
</pallas_src>

<mosaic_0001>
module attributes {stable_mosaic.version = 11 : i64} {
  func.func @_pe_dropout_kernel(%arg0: i32, %arg1: i32, %arg2: memref<1xi32, #tpu.memory_space<smem>>, %arg3: memref<2x256xf32, #tpu.memory_space<vmem>>, %arg4: memref<1x256xf32, #tpu.memory_space<vmem>>, %arg5: memref<2x256xf32, #tpu.memory_space<vmem>>) attributes {dimension_semantics = [#tpu.dimension_semantics<parallel>, #tpu.dimension_semantics<parallel>], iteration_bounds = array<i64: 1, 1>, scalar_prefetch = 1 : i64, scratch_operands = 0 : i64, tpu.core_type = #tpu.core_type<tc>, window_params = [{transform_indices = @transform_0, window_bounds = array<i64: 2, 256>}, {transform_indices = @transform_1, window_bounds = array<i64: 1, 256>}, {transform_indices = @transform_2, window_bounds = array<i64: 2, 256>}]} {
    %c0 = arith.constant 0 : index
    %c0_0 = arith.constant 0 : index
    %0 = vector.load %arg3[%c0, %c0_0] : memref<2x256xf32, #tpu.memory_space<vmem>>, vector<2x256xf32>
    %c0_1 = arith.constant 0 : index
    %c0_2 = arith.constant 0 : index
    %1 = vector.load %arg4[%c0_1, %c0_2] : memref<1x256xf32, #tpu.memory_space<vmem>>, vector<1x256xf32>
    %2 = vector.broadcast %1 : vector<1x256xf32> to vector<2x256xf32>
    %3 = arith.addf %0, %2 : vector<2x256xf32>
    %c0_3 = arith.constant 0 : index
    %c0_4 = arith.constant 0 : index
    %4 = vector.load %arg5[%c0_3, %c0_4] : memref<2x256xf32, #tpu.memory_space<vmem>>, vector<2x256xf32>
    tpu.vector_store %arg5[%c0_3, %c0_4], %3 {strides = array<i32>} : memref<2x256xf32, #tpu.memory_space<vmem>>, vector<2x256xf32>,
    return
  }
  func.func @transform_0(%arg0: i32, %arg1: i32, %arg2: memref<1xi32, #tpu.memory_space<smem>>) -> (i32, i32) {
    %c0_i32 = arith.constant 0 : i32
    return %arg1, %arg0 : i32, i32
  }
  func.func @transform_1(%arg0: i32, %arg1: i32, %arg2: memref<1xi32, #tpu.memory_space<smem>>) -> (i32, i32) {
    %c0_i32 = arith.constant 0 : i32
    %c0_i32_0 = arith.constant 0 : i32
    return %c0_i32, %arg0 : i32, i32
  }
  func.func @transform_2(%arg0: i32, %arg1: i32, %arg2: memref<1xi32, #tpu.memory_space<smem>>) -> (i32, i32) {
    %c0_i32 = arith.constant 0 : i32
    return %arg1, %arg0 : i32, i32
  }
}

</mosaic_0001>

<llo_original>
// kernel: tpu_custom_call.1
$region0: #{tpu_custom_call.1}
  #allocation0 [shape = 'u32[]', space=smem, size = 0x4, offset = 0x4, fixed_abs, tag = 'smem constant byte address 0x4 - core index']
  #allocation1 [shape = 'u32[144,128]{1,0:T(1,128)}', space=vmem, size = 0x12000, scoped, tag = 'internal scratch']
  #allocation2 [shape = 's32[1]{0}', space=sflag, size = 0x4, scoped, tag = 'scoped memory for tpu_custom_call.1']
  #allocation3 [shape = 's32[1]{0:T(128)S(6)}', space=smem, size = 0x200, scoped, tag = 'prefetched SMEM operand 0']
  %s0 = inlined_call_operand.<no memory space> [shape: s32[1], index: 0, kind: input, shape index: {}]
  %s1 = inlined_call_operand.hbm [shape: f32[2,256], index: 1, kind: input, shape index: {}]
  %s2 = inlined_call_operand.vmem [shape: f32[1,256], index: 2, kind: input, shape index: {}]
  %s3 = inlined_call_operand.hbm [shape: f32[2,256], index: 3, kind: output, shape index: {}]
  %s4 = sld [smem:[#allocation0]]
  $region22: #{tpu_custom_call.1} parent=0
    _
  %s6 = ssub.s32 1, %s4
  %s7 = scalar_select 0, %s6, %s4
  %8 = sst [smem:[#allocation3]] %s0
  $region1: #{tpu_custom_call.1} parent=0
    #allocation4 [shape = 'u8[2048]{0}', space=vmem, size = 0x800, scoped, tag = 'input window, operand 1, single buffered']
    #allocation5 [shape = 's32[1]{0}', space=sflag, size = 0x4, scoped, tag = 'scoped memory for tpu_custom_call.1']
    #allocation6 [shape = 's32[1]{0}', space=sflag, size = 0x4, scoped, tag = 'scoped memory for tpu_custom_call.1']
    #allocation7 [shape = 'u8[2048]{0}', space=vmem, size = 0x800, scoped, tag = 'output window, operand 0, single buffered']
    %9 = vsyncpa [#allocation5], 0
    %10 = vsyncpa [#allocation6], 0
    // Predicated region
    $region2: #{tpu_custom_call.1} parent=1 // pred_check
      _
    $region3: #{tpu_custom_call.1} parent=1 // pred_check_branch
      %12 = sbr.rel (0) target = $region5
    $region4: #{tpu_custom_call.1} parent=1 // pred_region
      %s14 = ssub.s32 64, 64
      %15 = vsyncadd [#allocation5], %s14
      %s17 = sshll.u32 [#allocation4], 4
      %s18 = int_to_ptr.vmem [resolvable:$true] %s17
      %20 = dma.hbm_to_vmem [thread:$0]  %s1, 64, %s18, [#allocation5]
    $region5: #{tpu_custom_call.1} parent=1 // pred_fallthru
      _
    // Predicated region
    $region6: #{tpu_custom_call.1} parent=1 // pred_check
      _
    $region7: #{tpu_custom_call.1} parent=1 // pred_check_branch
      %22 = sbr.rel (0) target = $region9
    $region8: #{tpu_custom_call.1} parent=1 // pred_region
      _
    $region9: #{tpu_custom_call.1} parent=1 // pred_fallthru
      _
    // Predicated region
    $region10: #{tpu_custom_call.1} parent=1 // pred_check
      _
    $region11: #{tpu_custom_call.1} parent=1 // pred_check_branch
      %24 = sbr.rel (0) target = $region13
    $region12: #{tpu_custom_call.1} parent=1 // pred_region
      %25 = dma.done [#allocation5], 64
    $region13: #{tpu_custom_call.1} parent=1 // pred_fallthru
      _
    %v26 = vld [vmem:[#allocation4] sm:$0xf]
    %v27 = vld [vmem:[%s2] sm:$0x3]
    %v29 = vlaneseq
    %v30 = vshrl.u32 %v29, 7
    %v31 = vsub.s32 0, %v30
    %v32 = vrot.slane %v27, %v31
    %v33 = vlaneseq
    %v34 = vshrl.u32 %v33, 7
    %v35 = vsub.s32 1, %v34
    %v36 = vrot.slane %v27, %v35
    %v37 = vcombine.low %v32, %v36
    %v39 = vunpack.c.l.s4 1983009808
    %v40 = vunpack.c.0.s8 %v39
    %v41 = vlaneseq
    %v42 = vshrl.u32 %v41, 7
    %v43 = vsub.s32 %v40, %v42
    %v44 = vrot.slane %v37, %v43
    %v46 = vadd.f32 %v26, %v44
    %47 = vst [vmem:[#allocation7] sm:$0xf] %v46
    // Predicated region
    $region14: #{tpu_custom_call.1} parent=1 // pred_check
      _
    $region15: #{tpu_custom_call.1} parent=1 // pred_check_branch
      %49 = sbr.rel (0) target = $region17
    $region16: #{tpu_custom_call.1} parent=1 // pred_region
      %s51 = ssub.s32 64, 64
      %52 = vsyncadd [#allocation6], %s51
      %s54 = sshll.u32 [#allocation7], 4
      %s55 = int_to_ptr.vmem [resolvable:$true] %s54
      %57 = dma.vmem_to_hbm [thread:$0]  %s55, 64, %s3, [#allocation6]
    $region17: #{tpu_custom_call.1} parent=1 // pred_fallthru
      _
    // Predicated region
    $region18: #{tpu_custom_call.1} parent=1 // pred_check
      _
    $region19: #{tpu_custom_call.1} parent=1 // pred_check_branch
      %59 = sbr.rel (0) target = $region21
    $region20: #{tpu_custom_call.1} parent=1 // pred_region
      %60 = dma.done [#allocation6], 64
    $region21: #{tpu_custom_call.1} parent=1 // pred_fallthru
      _
    %61 = vsyncpa [#allocation5], 1
    %62 = vsyncpa [#allocation6], 1

</llo_original>
